<compile_context>
chip_gen: v7x
topology: tpu7x:2x2x1
jax: 0.10.0
libtpu: 0.0.40
codegen_flags: <defaults>
</compile_context>

<pallas_src>
import numpy as np

import jax
import jax.numpy as jnp
from jax import lax
from jax.experimental import pallas as pl
from jax.experimental.pallas import tpu as pltpu


# ---------------------------------------------------------------------------
# Kernel
# ---------------------------------------------------------------------------
def _resblock_kernel(x_ref, mask_ref, wb1_ref, b1_ref, wb2_ref, b2_ref, o_ref):
    """Fused (conv3x3 + BN + ReLU) x 2 on batch-stacked, zero-bordered rows.

    x_ref   : (M+4, W*Cin)            zero-bordered, batch-stacked, lane-dense
    mask_ref: (M+2, 1)                1.0 on real rows, 0.0 on halo rows
    wb1_ref : (3, W*Cin, (W+2)*Cmid)  layer-1 banded weights (BN1 folded)
    b1_ref  : (1, (W+2)*Cmid)         layer-1 bias (zeros on width-pad cols)
    wb2_ref : (3, (W+2)*Cmid, W*Cout) layer-2 banded weights (BN2 folded)
    b2_ref  : (1, W*Cout)             layer-2 bias
    o_ref   : (M, W*Cout)             output rows (halo rows stripped by caller)
    """
    xp = x_ref[...]
    me = xp.shape[0] - 2            # M + 2 rows of the intermediate activation
    m = me - 2                      # M output rows

    # ---- layer 1: the 3 kh taps are static row-windows of the zero-bordered
    # input (no concatenates / rolls); register accumulation in f32 ----------
    h = jnp.dot(xp[0:me], wb1_ref[0], preferred_element_type=jnp.float32)
    h = h + jnp.dot(xp[1:me + 1], wb1_ref[1], preferred_element_type=jnp.float32)
    h = h + jnp.dot(xp[2:me + 2], wb1_ref[2], preferred_element_type=jnp.float32)
    # BN bias + ReLU, then zero the halo rows so they act as layer 2's H
    # padding (width-pad columns are already zero: zero weight cols + zero
    # bias + ReLU(0) = 0).
    h = jnp.maximum(h + b1_ref[...], 0.0) * mask_ref[...]
    h = h.astype(xp.dtype)

    # ---- layer 2 ------------------------------------------------------------
    out = jnp.dot(h[0:m], wb2_ref[0], preferred_element_type=jnp.float32)
    out = out + jnp.dot(h[1:m + 1], wb2_ref[1], preferred_element_type=jnp.float32)
    out = out + jnp.dot(h[2:m + 2], wb2_ref[2], preferred_element_type=jnp.float32)
    out = jnp.maximum(out + b2_ref[...], 0.0)

    o_ref[...] = out.astype(o_ref.dtype)    # single store per call


# ---------------------------------------------------------------------------
# One-time parameter preprocessing (hoisted out of the per-call forward)
# ---------------------------------------------------------------------------
def _fold_bn(gamma, beta, running_mean, running_var, eps=1e-5):
    scale = gamma / jnp.sqrt(running_var + eps)
    bias = beta - running_mean * scale
    return scale, bias


def _band_matrix(kw_taps, W, in_off, in_width, out_off, out_width):
    """Static 0/1 band tensor (KW, in_width, out_width) encoding the kw taps
    and the width zero-padding of a pad=1 conv."""
    band = np.zeros((kw_taps, in_width, out_width), np.float32)
    for kw in range(kw_taps):
        for t_o in range(W):            # true (unpadded) output column
            t_i = t_o - 1 + kw          # true input column for this tap
            wi = t_i + in_off           # stored input column
            if 0 <= wi < in_width:
                band[kw, wi, t_o + out_off] = 1.0
    return band


def _banded_weights(w_hwio, scale, W, in_off, in_width, out_off, out_width,
                    dtype):
    """(3,3,Cin,Cout) conv weights (+ folded BN scale) ->
       (3, in_width*Cin, out_width*Cout) banded matmul weights, one per kh."""
    KH, KW, Cin, Cout = w_hwio.shape
    ws = w_hwio * scale.reshape(1, 1, 1, Cout)
    band = jnp.asarray(_band_matrix(KW, W, in_off, in_width, out_off, out_width))
    # [kh, wi, ci, wo, co]
    wb = jnp.einsum("kiw,hkco->hicwo", band, ws)
    return wb.reshape(KH, in_width * Cin, out_width * Cout).astype(dtype)


def prepare_resblock_params(params, width, compute_dtype=jnp.bfloat16, eps=1e-5):
    """Fold BN into the conv weights and build the banded matmul weights and
    widened biases ONCE.  Call this outside the per-step path and feed the
    result to `resblock_forward`."""
    w1, w2 = params["w1"], params["w2"]
    Cout, Cin = w1.shape[0], w1.shape[1]
    # The PyTorch module declares both convs with in_channels=inchannels, so
    # its forward only works when inchannels == outchannels.
    assert Cin == Cout and w2.shape[0] == Cout and w2.shape[1] == Cin, (
        "ResBlock requires inchannels == outchannels")
    W, Wp = width, width + 2

    w1_hwio = jnp.transpose(w1, (2, 3, 1, 0))
    w2_hwio = jnp.transpose(w2, (2, 3, 1, 0))
    s1, b1 = _fold_bn(*params["bn1"], eps=eps)
    s2, b2 = _fold_bn(*params["bn2"], eps=eps)

    wb1 = _banded_weights(w1_hwio, s1, W, in_off=0, in_width=W,
                          out_off=1, out_width=Wp, dtype=compute_dtype)
    wb2 = _banded_weights(w2_hwio, s2, W, in_off=1, in_width=Wp,
                          out_off=0, out_width=W, dtype=compute_dtype)

    # Guard the full-resident banded-weight footprint (matters first on v7x's
    # 64 MiB VMEM).
    # TODO(synk): tile the output-width (N) dimension or switch to a K=9*Cin
    # im2col formulation before scaling W*C up.
    wb_bytes = (wb1.size + wb2.size) * jnp.dtype(compute_dtype).itemsize
    assert wb_bytes < 8 * 1024 * 1024, "banded weights too large; add N-tiling"

    # Biases broadcast along width; layer-1 bias is zero on the padding cols.
    b1_wide = jnp.pad(jnp.tile(b1, (W, 1)), ((1, 1), (0, 0)))
    b1_wide = b1_wide.reshape(1, Wp * Cout).astype(jnp.float32)
    b2_wide = jnp.tile(b2, (W, 1)).reshape(1, W * Cout).astype(jnp.float32)

    return dict(wb1=wb1, b1=b1_wide, wb2=wb2, b2=b2_wide)


# ---------------------------------------------------------------------------
# Forward
# ---------------------------------------------------------------------------
@jax.jit
def resblock_forward(x_nchw, prepped):
    """ResBlock forward.  Input/output in NCHW (kept only to match the
    PyTorch module interface; inside a larger network, keep the lane-dense
    (rows, W*C) layout between blocks and drop these transposes)."""
    B, Cin, H, W = x_nchw.shape
    wb1, b1w, wb2, b2w = prepped["wb1"], prepped["b1"], prepped["wb2"], prepped["b2"]
    cdt = wb1.dtype
    N1, N2 = wb1.shape[2], wb2.shape[2]
    Cout = N2 // W
    assert wb1.shape[1] == W * Cin, "prepared weights do not match input shape"
    Hp = H + 2
    M = B * Hp                      # batch stacked along the sublane (row) axis

    # NCHW -> (rows, W*C) lane-dense, with zero halo rows realizing pad=1 in H.
    x_nhwc = jnp.transpose(x_nchw, (0, 2, 3, 1))
    xp = jnp.pad(x_nhwc, ((0, 0), (1, 1), (0, 0), (0, 0)))   # per-image H halo
    xp = xp.reshape(M, W * Cin)
    xp = jnp.pad(xp, ((2, 2), (0, 0))).astype(cdt)           # global border rows

    # 0/1 mask of real (non-halo) rows of the intermediate activation; a
    # numpy constant, folded at compile time.
    pos = (np.arange(M + 2) - 1) % Hp
    row_mask = jnp.asarray(((pos >= 1) & (pos <= H)).astype(np.float32)[:, None])

    itemsize = jnp.dtype(cdt).itemsize
    flops = 2 * 3 * ((M + 2) * (W * Cin) * N1 + M * N1 * N2)
    bytes_accessed = ((M + 4) * W * Cin + 3 * W * Cin * N1 + 3 * N1 * N2) * itemsize
    bytes_accessed += (M + 2 + N1 + N2) * 4 + M * N2 * x_nchw.dtype.itemsize

    out = pl.pallas_call(
        _resblock_kernel,
        out_shape=jax.ShapeDtypeStruct((M, N2), x_nchw.dtype),
        # Single grid step: batch already stacked along sublanes, so v5e/v6e
        # (single TensorCore) pay the fixed per-step overhead once.
        # On v7x (2 TCs) an alternative is grid=(B,) with
        # dimension_semantics=("parallel",), one image per core; at this size
        # the per-core fixed overhead likely exceeds the 2-core gain.
        grid=(1,),
        in_specs=[
            pl.BlockSpec((M + 4, W * Cin), lambda i: (0, 0)),
            pl.BlockSpec((M + 2, 1), lambda i: (0, 0)),
            pl.BlockSpec((3, W * Cin, N1), lambda i: (0, 0, 0)),
            pl.BlockSpec((1, N1), lambda i: (0, 0)),
            pl.BlockSpec((3, N1, N2), lambda i: (0, 0, 0)),
            pl.BlockSpec((1, N2), lambda i: (0, 0)),
        ],
        out_specs=pl.BlockSpec((M, N2), lambda i: (0, 0)),
        compiler_params=pltpu.CompilerParams(
            dimension_semantics=("arbitrary",),
        ),
        cost_estimate=pl.CostEstimate(
            flops=int(flops), transcendentals=0,
            bytes_accessed=int(bytes_accessed)),
    )(xp, row_mask, wb1, b1w, wb2, b2w)

    # (M, W*Cout) -> strip per-image halo rows -> NCHW
    out = out.reshape(B, Hp, W, Cout)[:, 1:H + 1]
    return jnp.transpose(out, (0, 3, 1, 2))


# ---------------------------------------------------------------------------
# Parameter init + pure-JAX reference
# ---------------------------------------------------------------------------
def init_resblock_params(key, inchannels, outchannels):
    """Deterministic parameter init matching the module's shapes."""
    ks = jax.random.split(key, 10)
    fan_in = inchannels * 9
    std = (2.0 / fan_in) ** 0.5
    w1 = jax.random.normal(ks[0], (outchannels, inchannels, 3, 3), jnp.float32) * std
    w2 = jax.random.normal(ks[1], (outchannels, inchannels, 3, 3), jnp.float32) * std
    g1 = jax.random.uniform(ks[2], (outchannels,), jnp.float32, 0.5, 1.5)
    b1 = jax.random.normal(ks[3], (outchannels,), jnp.float32) * 0.1
    m1 = jax.random.normal(ks[4], (outchannels,), jnp.float32) * 0.1
    v1 = jax.random.uniform(ks[5], (outchannels,), jnp.float32, 0.5, 1.5)
    g2 = jax.random.uniform(ks[6], (outchannels,), jnp.float32, 0.5, 1.5)
    b2 = jax.random.normal(ks[7], (outchannels,), jnp.float32) * 0.1
    m2 = jax.random.normal(ks[8], (outchannels,), jnp.float32) * 0.1
    v2 = jax.random.uniform(ks[9], (outchannels,), jnp.float32, 0.5, 1.5)
    return dict(w1=w1, w2=w2, bn1=(g1, b1, m1, v1), bn2=(g2, b2, m2, v2))


def _reference_forward(x_nchw, params):
    """Pure-JAX reference (lax.conv) for correctness checking."""
    def conv_bn_relu(x, w, bn):
        y = lax.conv_general_dilated(
            x, w, window_strides=(1, 1), padding=((1, 1), (1, 1)),
            dimension_numbers=("NCHW", "OIHW", "NCHW"),
            precision=lax.Precision.HIGHEST)
        s, b = _fold_bn(*bn)
        y = y * s[None, :, None, None] + b[None, :, None, None]
        return jnp.maximum(y, 0.0)

    y = conv_bn_relu(x_nchw, params["w1"], params["bn1"])
    y = conv_bn_relu(y, params["w2"], params["bn2"])
    return y


# ---------------------------------------------------------------------------
if __name__ == "__main__":
    key = jax.random.PRNGKey(0)
    k_x, k_p = jax.random.split(key)

    # NOTE: the PyTorch module's second conv is declared with
    # in_channels=inchannels, so the forward only works when
    # inchannels == outchannels; we use 4 == 4 here.
    B, C, H, W = 2, 4, 16, 16
    x = jax.random.normal(k_x, (B, C, H, W), jnp.float32)
    params = init_resblock_params(k_p, inchannels=C, outchannels=C)

    ref = _reference_forward(x, params)

    # float32-operand path: tight numerical check of the kernel construction.
    prepped_f32 = prepare_resblock_params(params, W, compute_dtype=jnp.float32)
    out_f32 = jax.block_until_ready(resblock_forward(x, prepped_f32))
    assert out_f32.shape == (B, C, H, W)
    assert jnp.allclose(out_f32, ref, atol=2e-3, rtol=2e-3), "f32 mismatch vs reference"

    # Default bfloat16-operand path (f32 accumulation): widened tolerance, as
    # the intermediate activation is carried in bf16 between the two layers.
    prepped = prepare_resblock_params(params, W)            # bf16 operands
    out = jax.block_until_ready(resblock_forward(x, prepped))
    assert out.shape == (B, C, H, W)
    rel_l2 = float(jnp.linalg.norm(out - ref) / jnp.linalg.norm(ref))
    max_err = float(jnp.max(jnp.abs(out - ref)))
    assert rel_l2 < 0.03 and max_err < 0.25, (
        f"bf16 mismatch vs reference: rel_l2={rel_l2:.4f}, max_err={max_err:.4f}")

    print("KERNEL_OK")
</pallas_src>

<mosaic_0001>
module attributes {stable_mosaic.version = 11 : i64} {
  func.func @_resblock_kernel(%arg0: i32, %arg1: memref<40x64xf32, #tpu.memory_space<vmem>>, %arg2: memref<38x1xf32, #tpu.memory_space<vmem>>, %arg3: memref<3x64x72xf32, #tpu.memory_space<vmem>>, %arg4: memref<1x72xf32, #tpu.memory_space<vmem>>, %arg5: memref<3x72x64xf32, #tpu.memory_space<vmem>>, %arg6: memref<1x64xf32, #tpu.memory_space<vmem>>, %arg7: memref<36x64xf32, #tpu.memory_space<vmem>>) attributes {dimension_semantics = [#tpu.dimension_semantics<arbitrary>], iteration_bounds = array<i64: 1>, scalar_prefetch = 0 : i64, scratch_operands = 0 : i64, tpu.core_type = #tpu.core_type<tc>, window_params = [{pipeline_mode = #tpu.pipeline_mode<synchronous>, transform_indices = @transform_0, window_bounds = array<i64: 40, 64>}, {pipeline_mode = #tpu.pipeline_mode<synchronous>, transform_indices = @transform_1, window_bounds = array<i64: 38, 1>}, {pipeline_mode = #tpu.pipeline_mode<synchronous>, transform_indices = @transform_2, window_bounds = array<i64: 3, 64, 72>}, {pipeline_mode = #tpu.pipeline_mode<synchronous>, transform_indices = @transform_3, window_bounds = array<i64: 1, 72>}, {pipeline_mode = #tpu.pipeline_mode<synchronous>, transform_indices = @transform_4, window_bounds = array<i64: 3, 72, 64>}, {pipeline_mode = #tpu.pipeline_mode<synchronous>, transform_indices = @transform_5, window_bounds = array<i64: 1, 64>}, {pipeline_mode = #tpu.pipeline_mode<synchronous>, transform_indices = @transform_6, window_bounds = array<i64: 36, 64>}]} {
    %c0 = arith.constant 0 : index
    %c0_0 = arith.constant 0 : index
    %0 = vector.load %arg1[%c0, %c0_0] : memref<40x64xf32, #tpu.memory_space<vmem>>, vector<40x64xf32>
    %1 = vector.extract_strided_slice %0 {offsets = [0, 0], sizes = [38, 64], strides = [1, 1]} : vector<40x64xf32> to vector<38x64xf32>
    %c0_1 = arith.constant 0 : index
    %c0_2 = arith.constant 0 : index
    %c0_3 = arith.constant 0 : index
    %2 = vector.load %arg3[%c0_1, %c0_2, %c0_3] : memref<3x64x72xf32, #tpu.memory_space<vmem>>, vector<1x64x72xf32>
    %3 = vector.shape_cast %2 : vector<1x64x72xf32> to vector<64x72xf32>
    %cst = arith.constant dense<0.000000e+00> : vector<38x72xf32>
    %4 = tpu.matmul %1, %3, %cst {dimension_numbers = #tpu.dot_dimension_numbers<[1], [0], [0], [1], [0, 0, 1, 1], [], []>} : vector<38x64xf32>, vector<64x72xf32>, vector<38x72xf32> -> vector<38x72xf32>
    %5 = vector.extract_strided_slice %0 {offsets = [1, 0], sizes = [38, 64], strides = [1, 1]} : vector<40x64xf32> to vector<38x64xf32>
    %c1 = arith.constant 1 : index
    %c0_4 = arith.constant 0 : index
    %c0_5 = arith.constant 0 : index
    %6 = vector.load %arg3[%c1, %c0_4, %c0_5] : memref<3x64x72xf32, #tpu.memory_space<vmem>>, vector<1x64x72xf32>
    %7 = vector.shape_cast %6 : vector<1x64x72xf32> to vector<64x72xf32>
    %cst_6 = arith.constant dense<0.000000e+00> : vector<38x72xf32>
    %8 = tpu.matmul %5, %7, %cst_6 {dimension_numbers = #tpu.dot_dimension_numbers<[1], [0], [0], [1], [0, 0, 1, 1], [], []>} : vector<38x64xf32>, vector<64x72xf32>, vector<38x72xf32> -> vector<38x72xf32>
    %9 = arith.addf %4, %8 : vector<38x72xf32>
    %10 = vector.extract_strided_slice %0 {offsets = [2, 0], sizes = [38, 64], strides = [1, 1]} : vector<40x64xf32> to vector<38x64xf32>
    %c2 = arith.constant 2 : index
    %c0_7 = arith.constant 0 : index
    %c0_8 = arith.constant 0 : index
    %11 = vector.load %arg3[%c2, %c0_7, %c0_8] : memref<3x64x72xf32, #tpu.memory_space<vmem>>, vector<1x64x72xf32>
    %12 = vector.shape_cast %11 : vector<1x64x72xf32> to vector<64x72xf32>
    %cst_9 = arith.constant dense<0.000000e+00> : vector<38x72xf32>
    %13 = tpu.matmul %10, %12, %cst_9 {dimension_numbers = #tpu.dot_dimension_numbers<[1], [0], [0], [1], [0, 0, 1, 1], [], []>} : vector<38x64xf32>, vector<64x72xf32>, vector<38x72xf32> -> vector<38x72xf32>
    %14 = arith.addf %9, %13 : vector<38x72xf32>
    %c0_10 = arith.constant 0 : index
    %c0_11 = arith.constant 0 : index
    %15 = vector.load %arg4[%c0_10, %c0_11] : memref<1x72xf32, #tpu.memory_space<vmem>>, vector<1x72xf32>
    %16 = vector.broadcast %15 : vector<1x72xf32> to vector<38x72xf32>
    %17 = arith.addf %14, %16 : vector<38x72xf32>
    %cst_12 = arith.constant 0.000000e+00 : f32
    %18 = vector.broadcast %cst_12 : f32 to vector<38x72xf32>
    %19 = arith.maximumf %17, %18 : vector<38x72xf32>
    %c0_13 = arith.constant 0 : index
    %c0_14 = arith.constant 0 : index
    %20 = vector.load %arg2[%c0_13, %c0_14] : memref<38x1xf32, #tpu.memory_space<vmem>>, vector<38x1xf32>
    %21 = vector.broadcast %20 : vector<38x1xf32> to vector<38x72xf32>
    %22 = arith.mulf %19, %21 : vector<38x72xf32>
    %23 = vector.extract_strided_slice %22 {offsets = [0, 0], sizes = [36, 72], strides = [1, 1]} : vector<38x72xf32> to vector<36x72xf32>
    %c0_15 = arith.constant 0 : index
    %c0_16 = arith.constant 0 : index
    %c0_17 = arith.constant 0 : index
    %24 = vector.load %arg5[%c0_15, %c0_16, %c0_17] : memref<3x72x64xf32, #tpu.memory_space<vmem>>, vector<1x72x64xf32>
    %25 = vector.shape_cast %24 : vector<1x72x64xf32> to vector<72x64xf32>
    %cst_18 = arith.constant dense<0.000000e+00> : vector<36x64xf32>
    %26 = tpu.matmul %23, %25, %cst_18 {dimension_numbers = #tpu.dot_dimension_numbers<[1], [0], [0], [1], [0, 0, 1, 1], [], []>} : vector<36x72xf32>, vector<72x64xf32>, vector<36x64xf32> -> vector<36x64xf32>
    %27 = vector.extract_strided_slice %22 {offsets = [1, 0], sizes = [36, 72], strides = [1, 1]} : vector<38x72xf32> to vector<36x72xf32>
    %c1_19 = arith.constant 1 : index
    %c0_20 = arith.constant 0 : index
    %c0_21 = arith.constant 0 : index
    %28 = vector.load %arg5[%c1_19, %c0_20, %c0_21] : memref<3x72x64xf32, #tpu.memory_space<vmem>>, vector<1x72x64xf32>
    %29 = vector.shape_cast %28 : vector<1x72x64xf32> to vector<72x64xf32>
    %cst_22 = arith.constant dense<0.000000e+00> : vector<36x64xf32>
    %30 = tpu.matmul %27, %29, %cst_22 {dimension_numbers = #tpu.dot_dimension_numbers<[1], [0], [0], [1], [0, 0, 1, 1], [], []>} : vector<36x72xf32>, vector<72x64xf32>, vector<36x64xf32> -> vector<36x64xf32>
    %31 = arith.addf %26, %30 : vector<36x64xf32>
    %32 = vector.extract_strided_slice %22 {offsets = [2, 0], sizes = [36, 72], strides = [1, 1]} : vector<38x72xf32> to vector<36x72xf32>
    %c2_23 = arith.constant 2 : index
    %c0_24 = arith.constant 0 : index
    %c0_25 = arith.constant 0 : index
    %33 = vector.load %arg5[%c2_23, %c0_24, %c0_25] : memref<3x72x64xf32, #tpu.memory_space<vmem>>, vector<1x72x64xf32>
    %34 = vector.shape_cast %33 : vector<1x72x64xf32> to vector<72x64xf32>
    %cst_26 = arith.constant dense<0.000000e+00> : vector<36x64xf32>
    %35 = tpu.matmul %32, %34, %cst_26 {dimension_numbers = #tpu.dot_dimension_numbers<[1], [0], [0], [1], [0, 0, 1, 1], [], []>} : vector<36x72xf32>, vector<72x64xf32>, vector<36x64xf32> -> vector<36x64xf32>
    %36 = arith.addf %31, %35 : vector<36x64xf32>
    %c0_27 = arith.constant 0 : index
    %c0_28 = arith.constant 0 : index
    %37 = vector.load %arg6[%c0_27, %c0_28] : memref<1x64xf32, #tpu.memory_space<vmem>>, vector<1x64xf32>
    %38 = vector.broadcast %37 : vector<1x64xf32> to vector<36x64xf32>
    %39 = arith.addf %36, %38 : vector<36x64xf32>
    %cst_29 = arith.constant 0.000000e+00 : f32
    %40 = vector.broadcast %cst_29 : f32 to vector<36x64xf32>
    %41 = arith.maximumf %39, %40 : vector<36x64xf32>
    %c0_30 = arith.constant 0 : index
    %c0_31 = arith.constant 0 : index
    %42 = vector.load %arg7[%c0_30, %c0_31] : memref<36x64xf32, #tpu.memory_space<vmem>>, vector<36x64xf32>
    tpu.vector_store %arg7[%c0_30, %c0_31], %41 {strides = array<i32>} : memref<36x64xf32, #tpu.memory_space<vmem>>, vector<36x64xf32>,
    return
  }
  func.func @transform_0(%arg0: i32) -> (i32, i32) {
    %c0_i32 = arith.constant 0 : i32
    %c0_i32_0 = arith.constant 0 : i32
    %c0_i32_1 = arith.constant 0 : i32
    return %c0_i32, %c0_i32_0 : i32, i32
  }
  func.func @transform_1(%arg0: i32) -> (i32, i32) {
    %c0_i32 = arith.constant 0 : i32
    %c0_i32_0 = arith.constant 0 : i32
    %c0_i32_1 = arith.constant 0 : i32
    return %c0_i32, %c0_i32_0 : i32, i32
  }
  func.func @transform_2(%arg0: i32) -> (i32, i32, i32) {
    %c0_i32 = arith.constant 0 : i32
    %c0_i32_0 = arith.constant 0 : i32
    %c0_i32_1 = arith.constant 0 : i32
    %c0_i32_2 = arith.constant 0 : i32
    return %c0_i32, %c0_i32_0, %c0_i32_1 : i32, i32, i32
  }
  func.func @transform_3(%arg0: i32) -> (i32, i32) {
    %c0_i32 = arith.constant 0 : i32
    %c0_i32_0 = arith.constant 0 : i32
    %c0_i32_1 = arith.constant 0 : i32
    return %c0_i32, %c0_i32_0 : i32, i32
  }
  func.func @transform_4(%arg0: i32) -> (i32, i32, i32) {
    %c0_i32 = arith.constant 0 : i32
    %c0_i32_0 = arith.constant 0 : i32
    %c0_i32_1 = arith.constant 0 : i32
    %c0_i32_2 = arith.constant 0 : i32
    return %c0_i32, %c0_i32_0, %c0_i32_1 : i32, i32, i32
  }
  func.func @transform_5(%arg0: i32) -> (i32, i32) {
    %c0_i32 = arith.constant 0 : i32
    %c0_i32_0 = arith.constant 0 : i32
    %c0_i32_1 = arith.constant 0 : i32
    return %c0_i32, %c0_i32_0 : i32, i32
  }
  func.func @transform_6(%arg0: i32) -> (i32, i32) {
    %c0_i32 = arith.constant 0 : i32
    %c0_i32_0 = arith.constant 0 : i32
    %c0_i32_1 = arith.constant 0 : i32
    return %c0_i32, %c0_i32_0 : i32, i32
  }
}

</mosaic_0001>

<llo_original>
// kernel: resblock_forward.1
$region0: #{resblock_forward.1}
  #allocation0 [shape = 'u32[]', space=smem, size = 0x4, offset = 0x4, fixed_abs, tag = 'smem constant byte address 0x4 - core index']
  #allocation1 [shape = 'u32[144,128]{1,0:T(1,128)}', space=vmem, size = 0x12000, scoped, tag = 'internal scratch']
  %s0 = inlined_call_operand.vmem [shape: f32[40,64], index: 0, kind: input, shape index: {}]
  %s1 = inlined_call_operand.vmem [shape: f32[38,1], index: 1, kind: input, shape index: {}]
  %s2 = inlined_call_operand.vmem [shape: f32[3,64,72], index: 2, kind: input, shape index: {}]
  %s3 = inlined_call_operand.vmem [shape: f32[1,72], index: 3, kind: input, shape index: {}]
  %s4 = inlined_call_operand.vmem [shape: f32[3,72,64], index: 4, kind: input, shape index: {}]
  %s5 = inlined_call_operand.vmem [shape: f32[1,64], index: 5, kind: input, shape index: {}]
  %s6 = inlined_call_operand.vmem [shape: f32[36,64], index: 6, kind: output, shape index: {}]
  %s7 = sld [smem:[#allocation0]]
  $region34: #{resblock_forward.1} parent=0
    _
  %s9 = ssub.s32 1, %s7
  %s10 = scalar_select 0, %s9, %s7
  // Predicated region
  $region2: #{resblock_forward.1} parent=0 // pred_check
    _
  $region3: #{resblock_forward.1} parent=0 // pred_check_branch
    %12 = sbr.rel (0) target = $region5
  $region4: #{resblock_forward.1} parent=0 // pred_region
    _
  $region5: #{resblock_forward.1} parent=0 // pred_fallthru
    _
  // Predicated region
  $region6: #{resblock_forward.1} parent=0 // pred_check
    _
  $region7: #{resblock_forward.1} parent=0 // pred_check_branch
    %14 = sbr.rel (0) target = $region9
  $region8: #{resblock_forward.1} parent=0 // pred_region
    _
  $region9: #{resblock_forward.1} parent=0 // pred_fallthru
    _
  // Predicated region
  $region10: #{resblock_forward.1} parent=0 // pred_check
    _
  $region11: #{resblock_forward.1} parent=0 // pred_check_branch
    %16 = sbr.rel (0) target = $region13
  $region12: #{resblock_forward.1} parent=0 // pred_region
    _
  $region13: #{resblock_forward.1} parent=0 // pred_fallthru
    _
  // Predicated region
  $region14: #{resblock_forward.1} parent=0 // pred_check
    _
  $region15: #{resblock_forward.1} parent=0 // pred_check_branch
    %18 = sbr.rel (0) target = $region17
  $region16: #{resblock_forward.1} parent=0 // pred_region
    _
  $region17: #{resblock_forward.1} parent=0 // pred_fallthru
    _
  // Predicated region
  $region18: #{resblock_forward.1} parent=0 // pred_check
    _
  $region19: #{resblock_forward.1} parent=0 // pred_check_branch
    %20 = sbr.rel (0) target = $region21
  $region20: #{resblock_forward.1} parent=0 // pred_region
    _
  $region21: #{resblock_forward.1} parent=0 // pred_fallthru
    _
  // Predicated region
  $region22: #{resblock_forward.1} parent=0 // pred_check
    _
  $region23: #{resblock_forward.1} parent=0 // pred_check_branch
    %22 = sbr.rel (0) target = $region25
  $region24: #{resblock_forward.1} parent=0 // pred_region
    _
  $region25: #{resblock_forward.1} parent=0 // pred_fallthru
    _
  %v23 = vld [vmem:[%s0] sm:$0xff]
  %v24 = vld [vmem:[%s0 + $0x8] sm:$0xff]
  %v25 = vld [vmem:[%s0 + $0x10] sm:$0xff]
  %v26 = vld [vmem:[%s0 + $0x18] sm:$0xff]
  %v27 = vld [vmem:[%s0 + $0x20] sm:$0xff]
  %v28 = vld [vmem:[%s2] sm:$0xff]
  %v29 = vld [vmem:[%s2 + $0x8] sm:$0xff]
  %v30 = vld [vmem:[%s2 + $0x10] sm:$0xff]
  %v31 = vld [vmem:[%s2 + $0x18] sm:$0xff]
  %v32 = vld [vmem:[%s2 + $0x20] sm:$0xff]
  %v33 = vld [vmem:[%s2 + $0x28] sm:$0xff]
  %v34 = vld [vmem:[%s2 + $0x30] sm:$0xff]
  %v35 = vld [vmem:[%s2 + $0x38] sm:$0xff]
  %s36 = scalar_lea.vmem %s2, 64
  %v37 = vld [vmem:[%s36] sm:$0xff]
  %v38 = vld [vmem:[%s36 + $0x8] sm:$0xff]
  %v39 = vld [vmem:[%s36 + $0x10] sm:$0xff]
  %v40 = vld [vmem:[%s36 + $0x18] sm:$0xff]
  %v41 = vld [vmem:[%s36 + $0x20] sm:$0xff]
  %v42 = vld [vmem:[%s36 + $0x28] sm:$0xff]
  %v43 = vld [vmem:[%s36 + $0x30] sm:$0xff]
  %v44 = vld [vmem:[%s36 + $0x38] sm:$0xff]
  %vm50 = vcmask 1046528
  %v51 = vrot.slane %v23, 1
  %v52 = vrot.slane %v24, 1
  %v53 = vsel %vm50, %v51, %v52
  %v54 = vrot.slane %v25, 1
  %v55 = vsel %vm50, %v52, %v54
  %v56 = vrot.slane %v26, 1
  %v57 = vsel %vm50, %v54, %v56
  %v58 = vrot.slane %v27, 1
  %v59 = vsel %vm50, %v56, %v58
  %vm60 = vcmask 523264
  %v61 = vsel %vm60, %v53, 0
  %v63 = vsel %vm60, %v55, 0
  %v65 = vsel %vm60, %v57, 0
  %v67 = vsel %vm60, %v59, 0
  %v69 = vsel %vm60, %v58, 0
  %71 = vmatprep.subr.mxu0 0.0
  %72 = vmatpush1.msra.mxu0 %v37
  %73 = vmatprep.subr.mxu0 0.0
  %74 = vmatpush1.msra.mxu0 %v38
  %75 = vmatprep.subr.mxu0 0.0
  %76 = vmatpush1.msra.mxu0 %v39
  %77 = vmatprep.subr.mxu0 0.0
  %78 = vmatpush1.msra.mxu0 %v40
  %79 = vmatprep.subr.mxu0 0.0
  %80 = vmatpush1.msra.mxu0 %v41
  %81 = vmatprep.subr.mxu0 0.0
  %82 = vmatpush1.msra.mxu0 %v42
  %83 = vmatprep.subr.mxu0 0.0
  %84 = vmatpush1.msra.mxu0 %v43
  %85 = vmatprep.subr.mxu0 0.0
  %86 = vmatpush1.msra.mxu0 %v44
  %87 = vmatprep.subr.mxu0 0.0
  %88 = vmatpush1.msra.mxu0 0.0
  %89 = vmatprep.subr.mxu0 0.0
  %90 = vmatpush1.msra.mxu0 0.0
  %91 = vmatprep.subr.mxu0 0.0
  %92 = vmatpush1.msra.mxu0 0.0
  %93 = vmatprep.subr.mxu0 0.0
  %94 = vmatpush1.msra.mxu0 0.0
  %95 = vmatprep.subr.mxu0 0.0
  %96 = vmatpush1.msra.mxu0 0.0
  %97 = vmatprep.subr.mxu0 0.0
  %98 = vmatpush1.msra.mxu0 0.0
  %99 = vmatprep.subr.mxu0 0.0
  %100 = vmatpush1.msra.mxu0 0.0
  %101 = vmatprep.subr.mxu0 0.0
  %102 = vmatpush1.msra.mxu0 0.0
  %103 = vmatprep.subr.mxu0 0.0
  %104 = vmatpush1.msra.mxu0 0.0
  %105 = vmatprep.subr.mxu0 0.0
  %106 = vmatpush1.msra.mxu0 0.0
  %107 = vmatprep.subr.mxu0 0.0
  %108 = vmatpush1.msra.mxu0 0.0
  %109 = vmatprep.subr.mxu0 0.0
  %110 = vmatpush1.msra.mxu0 0.0
  %111 = vmatprep.subr.mxu0 0.0
  %112 = vmatpush1.msra.mxu0 0.0
  %113 = vmatprep.subr.mxu0 0.0
  %114 = vmatpush1.msra.mxu0 0.0
  %115 = vmatprep.subr.mxu0 0.0
  %116 = vmatpush1.msra.mxu0 0.0
  %117 = vmatprep.subr.mxu0 0.0
  %118 = vmatpush1.msra.mxu0 0.0
  %119 = vmatprep.subr.mxu0 0.0
  %120 = vmatpush1.msra.mxu0 0.0
  %121 = vmatprep.subr.mxu0 0.0
  %122 = vmatpush1.msra.mxu0 0.0
  %123 = vmatprep.subr.mxu0 0.0
  %124 = vmatpush1.msra.mxu0 0.0
  %125 = vmatprep.subr.mxu0 0.0
  %126 = vmatpush1.msra.mxu0 0.0
  %127 = vmatprep.subr.mxu0 0.0
  %128 = vmatpush1.msra.mxu0 0.0
  %129 = vmatprep.subr.mxu0 0.0
  %130 = vmatpush1.msra.mxu0 0.0
  %131 = vmatprep.subr.mxu0 0.0
  %132 = vmatpush1.msra.mxu0 0.0
  %133 = vmatprep.subr.mxu0 0.0
  %134 = vmatpush1.msra.mxu0 0.0
  %135 = vmatprep.mubr.f32.mxu0 0.0
  %136 = vmatmul.mubr.f32.gmra.mrb[0].mxu0 %v61
  %v137 = vpop.f32.mrb[0].mxu0
  %v138 = vadd.f32 0.0, %v137
  %v139 = vpop.f32.mrb[0].mxu0
  %140 = vmatprep.mubr.f32.mxu0 0.0
  %141 = vmatmul.mubr.f32.gmra.mrb[0].mxu0 %v63
  %v142 = vpop.f32.mrb[0].mxu0
  %v143 = vadd.f32 0.0, %v142
  %v144 = vpop.f32.mrb[0].mxu0
  %145 = vmatprep.mubr.f32.mxu0 0.0
  %146 = vmatmul.mubr.f32.gmra.mrb[0].mxu0 %v65
  %v147 = vpop.f32.mrb[0].mxu0
  %v148 = vadd.f32 0.0, %v147
  %v149 = vpop.f32.mrb[0].mxu0
  %150 = vmatprep.mubr.f32.mxu0 0.0
  %151 = vmatmul.mubr.f32.gmra.mrb[0].mxu0 %v67
  %v152 = vpop.f32.mrb[0].mxu0
  %v153 = vadd.f32 0.0, %v152
  %v154 = vpop.f32.mrb[0].mxu0
  %155 = vmatprep.mubr.f32.mxu0 0.0
  %156 = vmatmul.mubr.f32.gmra.mrb[0].mxu0 %v69
  %v157 = vpop.f32.mrb[0].mxu0
  %v158 = vadd.f32 0.0, %v157
  %v159 = vpop.f32.mrb[0].mxu0
  %160 = vdwg.mxu0
  %v161 = vsel %vm60, %v23, 0
  %v163 = vsel %vm60, %v24, 0
  %v165 = vsel %vm60, %v25, 0
  %v167 = vsel %vm60, %v26, 0
  %v169 = vsel %vm60, %v27, 0
  %171 = vmatprep.subr.mxu0 0.0
  %172 = vmatpush1.msra.mxu0 %v28
  %173 = vmatprep.subr.mxu0 0.0
  %174 = vmatpush1.msra.mxu0 %v29
  %175 = vmatprep.subr.mxu0 0.0
  %176 = vmatpush1.msra.mxu0 %v30
  %177 = vmatprep.subr.mxu0 0.0
  %178 = vmatpush1.msra.mxu0 %v31
  %179 = vmatprep.subr.mxu0 0.0
  %180 = vmatpush1.msra.mxu0 %v32
  %181 = vmatprep.subr.mxu0 0.0
  %182 = vmatpush1.msra.mxu0 %v33
  %183 = vmatprep.subr.mxu0 0.0
  %184 = vmatpush1.msra.mxu0 %v34
  %185 = vmatprep.subr.mxu0 0.0
  %186 = vmatpush1.msra.mxu0 %v35
  %187 = vmatprep.subr.mxu0 0.0
  %188 = vmatpush1.msra.mxu0 0.0
  %189 = vmatprep.subr.mxu0 0.0
  %190 = vmatpush1.msra.mxu0 0.0
  %191 = vmatprep.subr.mxu0 0.0
  %192 = vmatpush1.msra.mxu0 0.0
  %193 = vmatprep.subr.mxu0 0.0
  %194 = vmatpush1.msra.mxu0 0.0
  %195 = vmatprep.subr.mxu0 0.0
  %196 = vmatpush1.msra.mxu0 0.0
  %197 = vmatprep.subr.mxu0 0.0
  %198 = vmatpush1.msra.mxu0 0.0
  %199 = vmatprep.subr.mxu0 0.0
  %200 = vmatpush1.msra.mxu0 0.0
  %201 = vmatprep.subr.mxu0 0.0
  %202 = vmatpush1.msra.mxu0 0.0
  %203 = vmatprep.subr.mxu0 0.0
  %204 = vmatpush1.msra.mxu0 0.0
  %205 = vmatprep.subr.mxu0 0.0
  %206 = vmatpush1.msra.mxu0 0.0
  %207 = vmatprep.subr.mxu0 0.0
  %208 = vmatpush1.msra.mxu0 0.0
  %209 = vmatprep.subr.mxu0 0.0
  %210 = vmatpush1.msra.mxu0 0.0
  %211 = vmatprep.subr.mxu0 0.0
  %212 = vmatpush1.msra.mxu0 0.0
  %213 = vmatprep.subr.mxu0 0.0
  %214 = vmatpush1.msra.mxu0 0.0
  %215 = vmatprep.subr.mxu0 0.0
  %216 = vmatpush1.msra.mxu0 0.0
  %217 = vmatprep.subr.mxu0 0.0
  %218 = vmatpush1.msra.mxu0 0.0
  %219 = vmatprep.subr.mxu0 0.0
  %220 = vmatpush1.msra.mxu0 0.0
  %221 = vmatprep.subr.mxu0 0.0
  %222 = vmatpush1.msra.mxu0 0.0
  %223 = vmatprep.subr.mxu0 0.0
  %224 = vmatpush1.msra.mxu0 0.0
  %225 = vmatprep.subr.mxu0 0.0
  %226 = vmatpush1.msra.mxu0 0.0
  %227 = vmatprep.subr.mxu0 0.0
  %228 = vmatpush1.msra.mxu0 0.0
  %229 = vmatprep.subr.mxu0 0.0
  %230 = vmatpush1.msra.mxu0 0.0
  %231 = vmatprep.subr.mxu0 0.0
  %232 = vmatpush1.msra.mxu0 0.0
  %233 = vmatprep.subr.mxu0 0.0
  %234 = vmatpush1.msra.mxu0 0.0
  %235 = vmatprep.mubr.f32.mxu0 0.0
  %236 = vmatmul.mubr.f32.gmra.mrb[0].mxu0 %v161
  %v237 = vpop.f32.mrb[0].mxu0
  %v238 = vadd.f32 %v138, %v237
  %v239 = vpop.f32.mrb[0].mxu0
  %240 = vmatprep.mubr.f32.mxu0 0.0
  %241 = vmatmul.mubr.f32.gmra.mrb[0].mxu0 %v163
  %v242 = vpop.f32.mrb[0].mxu0
  %v243 = vadd.f32 %v143, %v242
  %v244 = vpop.f32.mrb[0].mxu0
  %245 = vmatprep.mubr.f32.mxu0 0.0
  %246 = vmatmul.mubr.f32.gmra.mrb[0].mxu0 %v165
  %v247 = vpop.f32.mrb[0].mxu0
  %v248 = vadd.f32 %v148, %v247
  %v249 = vpop.f32.mrb[0].mxu0
  %250 = vmatprep.mubr.f32.mxu0 0.0
  %251 = vmatmul.mubr.f32.gmra.mrb[0].mxu0 %v167
  %v252 = vpop.f32.mrb[0].mxu0
  %v253 = vadd.f32 %v153, %v252
  %v254 = vpop.f32.mrb[0].mxu0
  %255 = vmatprep.mubr.f32.mxu0 0.0
  %256 = vmatmul.mubr.f32.gmra.mrb[0].mxu0 %v169
  %v257 = vpop.f32.mrb[0].mxu0
  %v258 = vadd.f32 %v158, %v257
  %v259 = vpop.f32.mrb[0].mxu0
  %260 = vdwg.mxu0
  %s261 = scalar_lea.vmem %s2, 128
  %v262 = vld [vmem:[%s261] sm:$0xff]
  %v263 = vld [vmem:[%s261 + $0x8] sm:$0xff]
  %v264 = vld [vmem:[%s261 + $0x10] sm:$0xff]
  %v265 = vld [vmem:[%s261 + $0x18] sm:$0xff]
  %v266 = vld [vmem:[%s261 + $0x20] sm:$0xff]
  %v267 = vld [vmem:[%s261 + $0x28] sm:$0xff]
  %v268 = vld [vmem:[%s261 + $0x30] sm:$0xff]
  %v269 = vld [vmem:[%s261 + $0x38] sm:$0xff]
  %vm270 = vcmask 1045504
  %v271 = vrot.slane %v23, 2
  %v272 = vrot.slane %v24, 2
  %v273 = vsel %vm270, %v271, %v272
  %v274 = vrot.slane %v25, 2
  %v275 = vsel %vm270, %v272, %v274
  %v276 = vrot.slane %v26, 2
  %v277 = vsel %vm270, %v274, %v276
  %v278 = vrot.slane %v27, 2
  %v279 = vsel %vm270, %v276, %v278
  %v280 = vsel %vm60, %v273, 0
  %v282 = vsel %vm60, %v275, 0
  %v284 = vsel %vm60, %v277, 0
  %v286 = vsel %vm60, %v279, 0
  %v288 = vsel %vm60, %v278, 0
  %290 = vmatprep.subr.mxu0 0.0
  %291 = vmatpush1.msra.mxu0 %v262
  %292 = vmatprep.subr.mxu0 0.0
  %293 = vmatpush1.msra.mxu0 %v263
  %294 = vmatprep.subr.mxu0 0.0
  %295 = vmatpush1.msra.mxu0 %v264
  %296 = vmatprep.subr.mxu0 0.0
  %297 = vmatpush1.msra.mxu0 %v265
  %298 = vmatprep.subr.mxu0 0.0
  %299 = vmatpush1.msra.mxu0 %v266
  %300 = vmatprep.subr.mxu0 0.0
  %301 = vmatpush1.msra.mxu0 %v267
  %302 = vmatprep.subr.mxu0 0.0
  %303 = vmatpush1.msra.mxu0 %v268
  %304 = vmatprep.subr.mxu0 0.0
  %305 = vmatpush1.msra.mxu0 %v269
  %306 = vmatprep.subr.mxu0 0.0
  %307 = vmatpush1.msra.mxu0 0.0
  %308 = vmatprep.subr.mxu0 0.0
  %309 = vmatpush1.msra.mxu0 0.0
  %310 = vmatprep.subr.mxu0 0.0
  %311 = vmatpush1.msra.mxu0 0.0
  %312 = vmatprep.subr.mxu0 0.0
  %313 = vmatpush1.msra.mxu0 0.0
  %314 = vmatprep.subr.mxu0 0.0
  %315 = vmatpush1.msra.mxu0 0.0
  %316 = vmatprep.subr.mxu0 0.0
  %317 = vmatpush1.msra.mxu0 0.0
  %318 = vmatprep.subr.mxu0 0.0
  %319 = vmatpush1.msra.mxu0 0.0
  %320 = vmatprep.subr.mxu0 0.0
  %321 = vmatpush1.msra.mxu0 0.0
  %322 = vmatprep.subr.mxu0 0.0
  %323 = vmatpush1.msra.mxu0 0.0
  %324 = vmatprep.subr.mxu0 0.0
  %325 = vmatpush1.msra.mxu0 0.0
  %326 = vmatprep.subr.mxu0 0.0
  %327 = vmatpush1.msra.mxu0 0.0
  %328 = vmatprep.subr.mxu0 0.0
  %329 = vmatpush1.msra.mxu0 0.0
  %330 = vmatprep.subr.mxu0 0.0
  %331 = vmatpush1.msra.mxu0 0.0
  %332 = vmatprep.subr.mxu0 0.0
  %333 = vmatpush1.msra.mxu0 0.0
  %334 = vmatprep.subr.mxu0 0.0
  %335 = vmatpush1.msra.mxu0 0.0
  %336 = vmatprep.subr.mxu0 0.0
  %337 = vmatpush1.msra.mxu0 0.0
  %338 = vmatprep.subr.mxu0 0.0
  %339 = vmatpush1.msra.mxu0 0.0
  %340 = vmatprep.subr.mxu0 0.0
  %341 = vmatpush1.msra.mxu0 0.0
  %342 = vmatprep.subr.mxu0 0.0
  %343 = vmatpush1.msra.mxu0 0.0
  %344 = vmatprep.subr.mxu0 0.0
  %345 = vmatpush1.msra.mxu0 0.0
  %346 = vmatprep.subr.mxu0 0.0
  %347 = vmatpush1.msra.mxu0 0.0
  %348 = vmatprep.subr.mxu0 0.0
  %349 = vmatpush1.msra.mxu0 0.0
  %350 = vmatprep.subr.mxu0 0.0
  %351 = vmatpush1.msra.mxu0 0.0
  %352 = vmatprep.subr.mxu0 0.0
  %353 = vmatpush1.msra.mxu0 0.0
  %354 = vmatprep.mubr.f32.mxu0 0.0
  %355 = vmatmul.mubr.f32.gmra.mrb[0].mxu0 %v280
  %v356 = vpop.f32.mrb[0].mxu0
  %v357 = vadd.f32 0.0, %v356
  %v358 = vpop.f32.mrb[0].mxu0
  %359 = vmatprep.mubr.f32.mxu0 0.0
  %360 = vmatmul.mubr.f32.gmra.mrb[0].mxu0 %v282
  %v361 = vpop.f32.mrb[0].mxu0
  %v362 = vadd.f32 0.0, %v361
  %v363 = vpop.f32.mrb[0].mxu0
  %364 = vmatprep.mubr.f32.mxu0 0.0
  %365 = vmatmul.mubr.f32.gmra.mrb[0].mxu0 %v284
  %v366 = vpop.f32.mrb[0].mxu0
  %v367 = vadd.f32 0.0, %v366
  %v368 = vpop.f32.mrb[0].mxu0
  %369 = vmatprep.mubr.f32.mxu0 0.0
  %370 = vmatmul.mubr.f32.gmra.mrb[0].mxu0 %v286
  %v371 = vpop.f32.mrb[0].mxu0
  %v372 = vadd.f32 0.0, %v371
  %v373 = vpop.f32.mrb[0].mxu0
  %374 = vmatprep.mubr.f32.mxu0 0.0
  %375 = vmatmul.mubr.f32.gmra.mrb[0].mxu0 %v288
  %v376 = vpop.f32.mrb[0].mxu0
  %v377 = vadd.f32 0.0, %v376
  %v378 = vpop.f32.mrb[0].mxu0
  %379 = vdwg.mxu0
  %v380 = vadd.f32 %v238, %v357
  %v381 = vadd.f32 %v243, %v362
  %v382 = vadd.f32 %v248, %v367
  %v383 = vadd.f32 %v253, %v372
  %v384 = vadd.f32 %v258, %v377
  %v385 = vld [vmem:[%s3] sm:$0x1]
  %v387 = vlaneseq
  %v388 = vshrl.u32 %v387, 7
  %v389 = vsub.s32 0, %v388
  %v390 = vrot.slane %v385, %v389
  %v392 = vadd.f32 %v380, %v390
  %v393 = vadd.f32 %v381, %v390
  %v394 = vadd.f32 %v382, %v390
  %v395 = vadd.f32 %v383, %v390
  %v396 = vadd.f32 %v384, %v390
  %v397 = vmax.f32 %v392, 0.0
  %v398 = vmax.f32 %v393, 0.0
  %v399 = vmax.f32 %v394, 0.0
  %v400 = vmax.f32 %v395, 0.0
  %v401 = vmax.f32 %v396, 0.0
  %v402 = vld [vmem:[%s1] sm:$0xff]
  %v403 = vld [vmem:[%s1 + $0x8] sm:$0xff]
  %v404 = vld [vmem:[%s1 + $0x10] sm:$0xff]
  %v405 = vld [vmem:[%s1 + $0x18] sm:$0xff]
  %v406 = vld [vmem:[%s1 + $0x20] sm:$0x3f]
  %408 = vset.pattern.permute.xlu0 0
  %409 = vperm.xlu0 %408, %v402
  %v410 = vpop.permute.xlu0 %409
  %413 = vset.pattern.permute.xlu0 0
  %414 = vperm.xlu0 %413, %v403
  %v415 = vpop.permute.xlu0 %414
  %418 = vset.pattern.permute.xlu0 0
  %419 = vperm.xlu0 %418, %v404
  %v420 = vpop.permute.xlu0 %419
  %423 = vset.pattern.permute.xlu0 0
  %424 = vperm.xlu0 %423, %v405
  %v425 = vpop.permute.xlu0 %424
  %428 = vset.pattern.permute.xlu0 0
  %429 = vperm.xlu0 %428, %v406
  %v430 = vpop.permute.xlu0 %429
  %v432 = vmul.f32 %v397, %v410
  %v433 = vmul.f32 %v398, %v415
  %v434 = vmul.f32 %v399, %v420
  %v435 = vmul.f32 %v400, %v425
  %v436 = vmul.f32 %v401, %v430
  %v437 = vld [vmem:[%s4] sm:$0xff]
  %v438 = vld [vmem:[%s4 + $0x8] sm:$0xff]
  %v439 = vld [vmem:[%s4 + $0x10] sm:$0xff]
  %v440 = vld [vmem:[%s4 + $0x18] sm:$0xff]
  %v441 = vld [vmem:[%s4 + $0x20] sm:$0xff]
  %v442 = vld [vmem:[%s4 + $0x28] sm:$0xff]
  %v443 = vld [vmem:[%s4 + $0x30] sm:$0xff]
  %v444 = vld [vmem:[%s4 + $0x38] sm:$0xff]
  %v445 = vld [vmem:[%s4 + $0x40] sm:$0xff]
  %s446 = scalar_lea.vmem %s4, 72
  %v447 = vld [vmem:[%s446] sm:$0xff]
  %v448 = vld [vmem:[%s446 + $0x8] sm:$0xff]
  %v449 = vld [vmem:[%s446 + $0x10] sm:$0xff]
  %v450 = vld [vmem:[%s446 + $0x18] sm:$0xff]
  %v451 = vld [vmem:[%s446 + $0x20] sm:$0xff]
  %v452 = vld [vmem:[%s446 + $0x28] sm:$0xff]
  %v453 = vld [vmem:[%s446 + $0x30] sm:$0xff]
  %v454 = vld [vmem:[%s446 + $0x38] sm:$0xff]
  %v455 = vld [vmem:[%s446 + $0x40] sm:$0xff]
  %v461 = vrot.slane %v432, 1
  %v462 = vrot.slane %v433, 1
  %v463 = vsel %vm50, %v461, %v462
  %v464 = vrot.slane %v434, 1
  %v465 = vsel %vm50, %v462, %v464
  %v466 = vrot.slane %v435, 1
  %v467 = vsel %vm50, %v464, %v466
  %v468 = vrot.slane %v436, 1
  %v469 = vsel %vm50, %v466, %v468
  %vm470 = vcmask 588800
  %v471 = vsel %vm470, %v463, 0
  %v473 = vsel %vm470, %v465, 0
  %v475 = vsel %vm470, %v467, 0
  %v477 = vsel %vm470, %v469, 0
  %v479 = vsel %vm470, %v468, 0
  %481 = vmatprep.subr.mxu0 0.0
  %482 = vmatpush1.msra.mxu0 %v447
  %483 = vmatprep.subr.mxu0 0.0
  %484 = vmatpush1.msra.mxu0 %v448
  %485 = vmatprep.subr.mxu0 0.0
  %486 = vmatpush1.msra.mxu0 %v449
  %487 = vmatprep.subr.mxu0 0.0
  %488 = vmatpush1.msra.mxu0 %v450
  %489 = vmatprep.subr.mxu0 0.0
  %490 = vmatpush1.msra.mxu0 %v451
  %491 = vmatprep.subr.mxu0 0.0
  %492 = vmatpush1.msra.mxu0 %v452
  %493 = vmatprep.subr.mxu0 0.0
  %494 = vmatpush1.msra.mxu0 %v453
  %495 = vmatprep.subr.mxu0 0.0
  %496 = vmatpush1.msra.mxu0 %v454
  %497 = vmatprep.subr.mxu0 0.0
  %498 = vmatpush1.msra.mxu0 %v455
  %499 = vmatprep.subr.mxu0 0.0
  %500 = vmatpush1.msra.mxu0 0.0
  %501 = vmatprep.subr.mxu0 0.0
  %502 = vmatpush1.msra.mxu0 0.0
  %503 = vmatprep.subr.mxu0 0.0
  %504 = vmatpush1.msra.mxu0 0.0
  %505 = vmatprep.subr.mxu0 0.0
  %506 = vmatpush1.msra.mxu0 0.0
  %507 = vmatprep.subr.mxu0 0.0
  %508 = vmatpush1.msra.mxu0 0.0
  %509 = vmatprep.subr.mxu0 0.0
  %510 = vmatpush1.msra.mxu0 0.0
  %511 = vmatprep.subr.mxu0 0.0
  %512 = vmatpush1.msra.mxu0 0.0
  %513 = vmatprep.subr.mxu0 0.0
  %514 = vmatpush1.msra.mxu0 0.0
  %515 = vmatprep.subr.mxu0 0.0
  %516 = vmatpush1.msra.mxu0 0.0
  %517 = vmatprep.subr.mxu0 0.0
  %518 = vmatpush1.msra.mxu0 0.0
  %519 = vmatprep.subr.mxu0 0.0
  %520 = vmatpush1.msra.mxu0 0.0
  %521 = vmatprep.subr.mxu0 0.0
  %522 = vmatpush1.msra.mxu0 0.0
  %523 = vmatprep.subr.mxu0 0.0
  %524 = vmatpush1.msra.mxu0 0.0
  %525 = vmatprep.subr.mxu0 0.0
  %526 = vmatpush1.msra.mxu0 0.0
  %527 = vmatprep.subr.mxu0 0.0
  %528 = vmatpush1.msra.mxu0 0.0
  %529 = vmatprep.subr.mxu0 0.0
  %530 = vmatpush1.msra.mxu0 0.0
  %531 = vmatprep.subr.mxu0 0.0
  %532 = vmatpush1.msra.mxu0 0.0
  %533 = vmatprep.subr.mxu0 0.0
  %534 = vmatpush1.msra.mxu0 0.0
  %535 = vmatprep.subr.mxu0 0.0
  %536 = vmatpush1.msra.mxu0 0.0
  %537 = vmatprep.subr.mxu0 0.0
  %538 = vmatpush1.msra.mxu0 0.0
  %539 = vmatprep.subr.mxu0 0.0
  %540 = vmatpush1.msra.mxu0 0.0
  %541 = vmatprep.subr.mxu0 0.0
  %542 = vmatpush1.msra.mxu0 0.0
  %543 = vmatprep.subr.mxu0 0.0
  %544 = vmatpush1.msra.mxu0 0.0
  %545 = vmatprep.mubr.f32.mxu0 0.0
  %546 = vmatmul.mubr.f32.gmra.mrb[0].mxu0 %v471
  %v547 = vpop.f32.mrb[0].mxu0
  %v548 = vadd.f32 0.0, %v547
  %v549 = vpop.f32.mrb[0].mxu0
  %550 = vmatprep.mubr.f32.mxu0 0.0
  %551 = vmatmul.mubr.f32.gmra.mrb[0].mxu0 %v473
  %v552 = vpop.f32.mrb[0].mxu0
  %v553 = vadd.f32 0.0, %v552
  %v554 = vpop.f32.mrb[0].mxu0
  %555 = vmatprep.mubr.f32.mxu0 0.0
  %556 = vmatmul.mubr.f32.gmra.mrb[0].mxu0 %v475
  %v557 = vpop.f32.mrb[0].mxu0
  %v558 = vadd.f32 0.0, %v557
  %v559 = vpop.f32.mrb[0].mxu0
  %560 = vmatprep.mubr.f32.mxu0 0.0
  %561 = vmatmul.mubr.f32.gmra.mrb[0].mxu0 %v477
  %v562 = vpop.f32.mrb[0].mxu0
  %v563 = vadd.f32 0.0, %v562
  %v564 = vpop.f32.mrb[0].mxu0
  %565 = vmatprep.mubr.f32.mxu0 0.0
  %566 = vmatmul.mubr.f32.gmra.mrb[0].mxu0 %v479
  %v567 = vpop.f32.mrb[0].mxu0
  %v568 = vadd.f32 0.0, %v567
  %v569 = vpop.f32.mrb[0].mxu0
  %570 = vdwg.mxu0
  %v571 = vsel %vm470, %v432, 0
  %v573 = vsel %vm470, %v433, 0
  %v575 = vsel %vm470, %v434, 0
  %v577 = vsel %vm470, %v435, 0
  %v579 = vsel %vm470, %v436, 0
  %581 = vmatprep.subr.mxu0 0.0
  %582 = vmatpush1.msra.mxu0 %v437
  %583 = vmatprep.subr.mxu0 0.0
  %584 = vmatpush1.msra.mxu0 %v438
  %585 = vmatprep.subr.mxu0 0.0
  %586 = vmatpush1.msra.mxu0 %v439
  %587 = vmatprep.subr.mxu0 0.0
  %588 = vmatpush1.msra.mxu0 %v440
  %589 = vmatprep.subr.mxu0 0.0
  %590 = vmatpush1.msra.mxu0 %v441
  %591 = vmatprep.subr.mxu0 0.0
  %592 = vmatpush1.msra.mxu0 %v442
  %593 = vmatprep.subr.mxu0 0.0
  %594 = vmatpush1.msra.mxu0 %v443
  %595 = vmatprep.subr.mxu0 0.0
  %596 = vmatpush1.msra.mxu0 %v444
  %597 = vmatprep.subr.mxu0 0.0
  %598 = vmatpush1.msra.mxu0 %v445
  %599 = vmatprep.subr.mxu0 0.0
  %600 = vmatpush1.msra.mxu0 0.0
  %601 = vmatprep.subr.mxu0 0.0
  %602 = vmatpush1.msra.mxu0 0.0
  %603 = vmatprep.subr.mxu0 0.0
  %604 = vmatpush1.msra.mxu0 0.0
  %605 = vmatprep.subr.mxu0 0.0
  %606 = vmatpush1.msra.mxu0 0.0
  %607 = vmatprep.subr.mxu0 0.0
  %608 = vmatpush1.msra.mxu0 0.0
  %609 = vmatprep.subr.mxu0 0.0
  %610 = vmatpush1.msra.mxu0 0.0
  %611 = vmatprep.subr.mxu0 0.0
  %612 = vmatpush1.msra.mxu0 0.0
  %613 = vmatprep.subr.mxu0 0.0
  %614 = vmatpush1.msra.mxu0 0.0
  %615 = vmatprep.subr.mxu0 0.0
  %616 = vmatpush1.msra.mxu0 0.0
  %617 = vmatprep.subr.mxu0 0.0
  %618 = vmatpush1.msra.mxu0 0.0
  %619 = vmatprep.subr.mxu0 0.0
  %620 = vmatpush1.msra.mxu0 0.0
  %621 = vmatprep.subr.mxu0 0.0
  %622 = vmatpush1.msra.mxu0 0.0
  %623 = vmatprep.subr.mxu0 0.0
  %624 = vmatpush1.msra.mxu0 0.0
  %625 = vmatprep.subr.mxu0 0.0
  %626 = vmatpush1.msra.mxu0 0.0
  %627 = vmatprep.subr.mxu0 0.0
  %628 = vmatpush1.msra.mxu0 0.0
  %629 = vmatprep.subr.mxu0 0.0
  %630 = vmatpush1.msra.mxu0 0.0
  %631 = vmatprep.subr.mxu0 0.0
  %632 = vmatpush1.msra.mxu0 0.0
  %633 = vmatprep.subr.mxu0 0.0
  %634 = vmatpush1.msra.mxu0 0.0
  %635 = vmatprep.subr.mxu0 0.0
  %636 = vmatpush1.msra.mxu0 0.0
  %637 = vmatprep.subr.mxu0 0.0
  %638 = vmatpush1.msra.mxu0 0.0
  %639 = vmatprep.subr.mxu0 0.0
  %640 = vmatpush1.msra.mxu0 0.0
  %641 = vmatprep.subr.mxu0 0.0
  %642 = vmatpush1.msra.mxu0 0.0
  %643 = vmatprep.subr.mxu0 0.0
  %644 = vmatpush1.msra.mxu0 0.0
  %645 = vmatprep.mubr.f32.mxu0 0.0
  %646 = vmatmul.mubr.f32.gmra.mrb[0].mxu0 %v571
  %v647 = vpop.f32.mrb[0].mxu0
  %v648 = vadd.f32 %v548, %v647
  %v649 = vpop.f32.mrb[0].mxu0
  %650 = vmatprep.mubr.f32.mxu0 0.0
  %651 = vmatmul.mubr.f32.gmra.mrb[0].mxu0 %v573
  %v652 = vpop.f32.mrb[0].mxu0
  %v653 = vadd.f32 %v553, %v652
  %v654 = vpop.f32.mrb[0].mxu0
  %655 = vmatprep.mubr.f32.mxu0 0.0
  %656 = vmatmul.mubr.f32.gmra.mrb[0].mxu0 %v575
  %v657 = vpop.f32.mrb[0].mxu0
  %v658 = vadd.f32 %v558, %v657
  %v659 = vpop.f32.mrb[0].mxu0
  %660 = vmatprep.mubr.f32.mxu0 0.0
  %661 = vmatmul.mubr.f32.gmra.mrb[0].mxu0 %v577
  %v662 = vpop.f32.mrb[0].mxu0
  %v663 = vadd.f32 %v563, %v662
  %v664 = vpop.f32.mrb[0].mxu0
  %665 = vmatprep.mubr.f32.mxu0 0.0
  %666 = vmatmul.mubr.f32.gmra.mrb[0].mxu0 %v579
  %v667 = vpop.f32.mrb[0].mxu0
  %v668 = vadd.f32 %v568, %v667
  %v669 = vpop.f32.mrb[0].mxu0
  %670 = vdwg.mxu0
  %s671 = scalar_lea.vmem %s4, 144
  %v672 = vld [vmem:[%s671] sm:$0xff]
  %v673 = vld [vmem:[%s671 + $0x8] sm:$0xff]
  %v674 = vld [vmem:[%s671 + $0x10] sm:$0xff]
  %v675 = vld [vmem:[%s671 + $0x18] sm:$0xff]
  %v676 = vld [vmem:[%s671 + $0x20] sm:$0xff]
  %v677 = vld [vmem:[%s671 + $0x28] sm:$0xff]
  %v678 = vld [vmem:[%s671 + $0x30] sm:$0xff]
  %v679 = vld [vmem:[%s671 + $0x38] sm:$0xff]
  %v680 = vld [vmem:[%s671 + $0x40] sm:$0xff]
  %v681 = vrot.slane %v432, 2
  %v682 = vrot.slane %v433, 2
  %v683 = vsel %vm270, %v681, %v682
  %v684 = vrot.slane %v434, 2
  %v685 = vsel %vm270, %v682, %v684
  %v686 = vrot.slane %v435, 2
  %v687 = vsel %vm270, %v684, %v686
  %v688 = vrot.slane %v436, 2
  %v689 = vsel %vm270, %v686, %v688
  %v690 = vsel %vm470, %v683, 0
  %v692 = vsel %vm470, %v685, 0
  %v694 = vsel %vm470, %v687, 0
  %v696 = vsel %vm470, %v689, 0
  %v698 = vsel %vm470, %v688, 0
  %700 = vmatprep.subr.mxu0 0.0
  %701 = vmatpush1.msra.mxu0 %v672
  %702 = vmatprep.subr.mxu0 0.0
  %703 = vmatpush1.msra.mxu0 %v673
  %704 = vmatprep.subr.mxu0 0.0
  %705 = vmatpush1.msra.mxu0 %v674
  %706 = vmatprep.subr.mxu0 0.0
  %707 = vmatpush1.msra.mxu0 %v675
  %708 = vmatprep.subr.mxu0 0.0
  %709 = vmatpush1.msra.mxu0 %v676
  %710 = vmatprep.subr.mxu0 0.0
  %711 = vmatpush1.msra.mxu0 %v677
  %712 = vmatprep.subr.mxu0 0.0
  %713 = vmatpush1.msra.mxu0 %v678
  %714 = vmatprep.subr.mxu0 0.0
  %715 = vmatpush1.msra.mxu0 %v679
  %716 = vmatprep.subr.mxu0 0.0
  %717 = vmatpush1.msra.mxu0 %v680
  %718 = vmatprep.subr.mxu0 0.0
  %719 = vmatpush1.msra.mxu0 0.0
  %720 = vmatprep.subr.mxu0 0.0
  %721 = vmatpush1.msra.mxu0 0.0
  %722 = vmatprep.subr.mxu0 0.0
  %723 = vmatpush1.msra.mxu0 0.0
  %724 = vmatprep.subr.mxu0 0.0
  %725 = vmatpush1.msra.mxu0 0.0
  %726 = vmatprep.subr.mxu0 0.0
  %727 = vmatpush1.msra.mxu0 0.0
  %728 = vmatprep.subr.mxu0 0.0
  %729 = vmatpush1.msra.mxu0 0.0
  %730 = vmatprep.subr.mxu0 0.0
  %731 = vmatpush1.msra.mxu0 0.0
  %732 = vmatprep.subr.mxu0 0.0
  %733 = vmatpush1.msra.mxu0 0.0
  %734 = vmatprep.subr.mxu0 0.0
  %735 = vmatpush1.msra.mxu0 0.0
  %736 = vmatprep.subr.mxu0 0.0
  %737 = vmatpush1.msra.mxu0 0.0
  %738 = vmatprep.subr.mxu0 0.0
  %739 = vmatpush1.msra.mxu0 0.0
  %740 = vmatprep.subr.mxu0 0.0
  %741 = vmatpush1.msra.mxu0 0.0
  %742 = vmatprep.subr.mxu0 0.0
  %743 = vmatpush1.msra.mxu0 0.0
  %744 = vmatprep.subr.mxu0 0.0
  %745 = vmatpush1.msra.mxu0 0.0
  %746 = vmatprep.subr.mxu0 0.0
  %747 = vmatpush1.msra.mxu0 0.0
  %748 = vmatprep.subr.mxu0 0.0
  %749 = vmatpush1.msra.mxu0 0.0
  %750 = vmatprep.subr.mxu0 0.0
  %751 = vmatpush1.msra.mxu0 0.0
  %752 = vmatprep.subr.mxu0 0.0
  %753 = vmatpush1.msra.mxu0 0.0
  %754 = vmatprep.subr.mxu0 0.0
  %755 = vmatpush1.msra.mxu0 0.0
  %756 = vmatprep.subr.mxu0 0.0
  %757 = vmatpush1.msra.mxu0 0.0
  %758 = vmatprep.subr.mxu0 0.0
  %759 = vmatpush1.msra.mxu0 0.0
  %760 = vmatprep.subr.mxu0 0.0
  %761 = vmatpush1.msra.mxu0 0.0
  %762 = vmatprep.subr.mxu0 0.0
  %763 = vmatpush1.msra.mxu0 0.0
  %764 = vmatprep.mubr.f32.mxu0 0.0
  %765 = vmatmul.mubr.f32.gmra.mrb[0].mxu0 %v690
  %v766 = vpop.f32.mrb[0].mxu0
  %v767 = vadd.f32 0.0, %v766
  %v768 = vpop.f32.mrb[0].mxu0
  %769 = vmatprep.mubr.f32.mxu0 0.0
  %770 = vmatmul.mubr.f32.gmra.mrb[0].mxu0 %v692
  %v771 = vpop.f32.mrb[0].mxu0
  %v772 = vadd.f32 0.0, %v771
  %v773 = vpop.f32.mrb[0].mxu0
  %774 = vmatprep.mubr.f32.mxu0 0.0
  %775 = vmatmul.mubr.f32.gmra.mrb[0].mxu0 %v694
  %v776 = vpop.f32.mrb[0].mxu0
  %v777 = vadd.f32 0.0, %v776
  %v778 = vpop.f32.mrb[0].mxu0
  %779 = vmatprep.mubr.f32.mxu0 0.0
  %780 = vmatmul.mubr.f32.gmra.mrb[0].mxu0 %v696
  %v781 = vpop.f32.mrb[0].mxu0
  %v782 = vadd.f32 0.0, %v781
  %v783 = vpop.f32.mrb[0].mxu0
  %784 = vmatprep.mubr.f32.mxu0 0.0
  %785 = vmatmul.mubr.f32.gmra.mrb[0].mxu0 %v698
  %v786 = vpop.f32.mrb[0].mxu0
  %v787 = vadd.f32 0.0, %v786
  %v788 = vpop.f32.mrb[0].mxu0
  %789 = vdwg.mxu0
  %v790 = vadd.f32 %v648, %v767
  %v791 = vadd.f32 %v653, %v772
  %v792 = vadd.f32 %v658, %v777
  %v793 = vadd.f32 %v663, %v782
  %v794 = vadd.f32 %v668, %v787
  %v795 = vld [vmem:[%s5] sm:$0x1]
  %v797 = vlaneseq
  %v798 = vshrl.u32 %v797, 7
  %v799 = vsub.s32 0, %v798
  %v800 = vrot.slane %v795, %v799
  %v802 = vadd.f32 %v790, %v800
  %v803 = vadd.f32 %v791, %v800
  %v804 = vadd.f32 %v792, %v800
  %v805 = vadd.f32 %v793, %v800
  %v806 = vadd.f32 %v794, %v800
  %v807 = vmax.f32 %v802, 0.0
  %v808 = vmax.f32 %v803, 0.0
  %v809 = vmax.f32 %v804, 0.0
  %v810 = vmax.f32 %v805, 0.0
  %v811 = vmax.f32 %v806, 0.0
  %812 = vst.msk [vmem:[%s6] sm:$0xff] %vm60, %v807
  %813 = vst.msk [vmem:[%s6 + $0x8] sm:$0xff] %vm60, %v808
  %814 = vst.msk [vmem:[%s6 + $0x10] sm:$0xff] %vm60, %v809
  %815 = vst.msk [vmem:[%s6 + $0x18] sm:$0xff] %vm60, %v810
  %vm816 = vcmask 519168
  %817 = vst.msk [vmem:[%s6 + $0x20] sm:$0xf] %vm816, %v811
  // Predicated region
  $region26: #{resblock_forward.1} parent=0 // pred_check
    _
  $region27: #{resblock_forward.1} parent=0 // pred_check_branch
    %819 = sbr.rel (0) target = $region29
  $region28: #{resblock_forward.1} parent=0 // pred_region
    _
  $region29: #{resblock_forward.1} parent=0 // pred_fallthru
    _
  // Predicated region
  $region30: #{resblock_forward.1} parent=0 // pred_check
    _
  $region31: #{resblock_forward.1} parent=0 // pred_check_branch
    %821 = sbr.rel (0) target = $region33
  $region32: #{resblock_forward.1} parent=0 // pred_region
    _
  $region33: #{resblock_forward.1} parent=0 // pred_fallthru
    _

</llo_original>
